<compile_context>
chip_gen: v7x
topology: tpu7x:2x2x1
jax: 0.10.0
libtpu: 0.0.40
codegen_flags: <defaults>
</compile_context>

<pallas_src>
import jax
import jax.numpy as jnp
from jax.experimental import pallas as pl
from jax.experimental.pallas import tpu as pltpu


def _mlp_kernel(x_ref, w1_ref, b1_ref, w2_ref, b2_ref, w3_ref, b3_ref, o_ref):
    # x_ref: (tm, d_in) tile of the batch at natural feature width.
    # Weights are resident (constant index_map) and lane-padded to 128 on the
    # hidden dims so h1/h2 are lane-dense; output width stays natural.
    x = x_ref[...]

    # hidden layer 1 + ReLU  (f32 MXU accumulation)
    h1 = jnp.dot(x, w1_ref[...], preferred_element_type=jnp.float32)
    h1 = jnp.maximum(h1 + b1_ref[...], 0.0)
    h1 = h1.astype(w2_ref.dtype)

    # hidden layer 2 + ReLU
    h2 = jnp.dot(h1, w2_ref[...], preferred_element_type=jnp.float32)
    h2 = jnp.maximum(h2 + b2_ref[...], 0.0)
    h2 = h2.astype(w3_ref.dtype)

    # output layer (no activation)
    out = jnp.dot(h2, w3_ref[...], preferred_element_type=jnp.float32)
    out = out + b3_ref[...]

    o_ref[...] = out.astype(o_ref.dtype)


def _round_up(n, m):
    return ((n + m - 1) // m) * m


def ner_ff_nn_forward(x, params, *, tm=2048, compute_dtype=jnp.float32):
    """Fused MLP forward.

    x: (B, input_size) float32.
    params: [(W1, b1), (W2, b2), (W3, b3)] with W stored as (in, out).
    tm: requested batch tile (auto-clamped; multiple of 8).
    compute_dtype: matmul operand dtype. jnp.bfloat16 recommended on v6e/v7x
      (halves the binding HBM read; accumulation stays f32). Default f32 is
      bit-exact vs the reference.
    """
    (w1, b1), (w2, b2), (w3, b3) = params
    B, d_in = x.shape
    h1 = w1.shape[1]
    h2 = w2.shape[1]
    d_out = w3.shape[1]

    LANE = 128
    h1_p = _round_up(h1, LANE)
    h2_p = _round_up(h2, LANE)

    # --- batch tile selection -------------------------------------------------
    # Big tiles amortize the ~0.35 us/step overhead; keep a multiple of 8,
    # clamp to the batch, and (when B allows) keep >= 4 grid steps so both
    # v7x TensorCores get work with per-core double-buffering.
    tm = max(8, min(_round_up(tm, 8), _round_up(B, 8)))
    if pl.cdiv(B, tm) < 4 and B >= 32:
        tm = max(8, _round_up(pl.cdiv(B, 4), 8))
    grid = (pl.cdiv(B, tm),)

    cd = compute_dtype

    # Zero-padding of weights/biases on the hidden dims is exact: padded rows
    # and cols contribute 0, padded bias entries are 0 and ReLU(0)=0.
    xc = x.astype(cd)                                                   # (B, d_in)
    w1p = jnp.pad(w1, ((0, 0), (0, h1_p - h1))).astype(cd)              # (d_in, 128)
    w2p = jnp.pad(w2, ((0, h1_p - h1), (0, h2_p - h2))).astype(cd)      # (128, 128)
    w3p = jnp.pad(w3, ((0, h2_p - h2), (0, 0))).astype(cd)              # (128, d_out)
    b1p = jnp.pad(b1, (0, h1_p - h1)).reshape(1, h1_p).astype(jnp.float32)
    b2p = jnp.pad(b2, (0, h2_p - h2)).reshape(1, h2_p).astype(jnp.float32)
    b3p = b3.reshape(1, d_out).astype(jnp.float32)

    itemsize = jnp.dtype(cd).itemsize
    flops = 2 * B * (d_in * h1_p + h1_p * h2_p + h2_p * d_out)
    bytes_accessed = (
        (xc.size + w1p.size + w2p.size + w3p.size) * itemsize
        + (b1p.size + b2p.size + b3p.size) * 4
        + B * d_out * 4
    )
    cost = pl.CostEstimate(
        flops=flops, transcendentals=0, bytes_accessed=bytes_accessed)

    # Resident (never re-fetched) operands: constant index_map.
    resident = lambda shape: pl.BlockSpec(shape, lambda i: (0, 0))

    out = pl.pallas_call(
        _mlp_kernel,
        out_shape=jax.ShapeDtypeStruct((B, d_out), jnp.float32),
        grid_spec=pltpu.PrefetchScalarGridSpec(
            num_scalar_prefetch=0,
            grid=grid,
            in_specs=[
                pl.BlockSpec((tm, d_in), lambda i: (i, 0)),   # x tile (natural width)
                resident((d_in, h1_p)),                       # W1
                resident((1, h1_p)),                          # b1
                resident((h1_p, h2_p)),                       # W2
                resident((1, h2_p)),                          # b2
                resident((h2_p, d_out)),                      # W3
                resident((1, d_out)),                         # b3
            ],
            out_specs=pl.BlockSpec((tm, d_out), lambda i: (i, 0)),  # natural width
        ),
        compiler_params=pltpu.CompilerParams(
            dimension_semantics=("parallel",)),
        cost_estimate=cost,
    )(xc, w1p, b1p, w2p, b2p, w3p, b3p)

    return out


def init_params(key, input_size, hidden_sizes, output_size):
    """Deterministic init mimicking PyTorch Linear (uniform +/- 1/sqrt(fan_in)).

    Weights are returned already transposed to (in_features, out_features).
    """
    sizes = [input_size] + list(hidden_sizes) + [output_size]
    params = []
    for fan_in, fan_out in zip(sizes[:-1], sizes[1:]):
        key, kw, kb = jax.random.split(key, 3)
        bound = 1.0 / jnp.sqrt(jnp.float32(fan_in))
        w = jax.random.uniform(kw, (fan_in, fan_out), jnp.float32, -bound, bound)
        b = jax.random.uniform(kb, (fan_out,), jnp.float32, -bound, bound)
        params.append((w, b))
    return params


def reference_forward(x, params):
    (w1, b1), (w2, b2), (w3, b3) = params
    h = jnp.maximum(x @ w1 + b1, 0.0)
    h = jnp.maximum(h @ w2 + b2, 0.0)
    return h @ w3 + b3


# TODO(synk): train_model / test_model / run (Adam, CE loss, sklearn metrics)
# are training/eval utilities, not part of the forward pass; not translated.

if __name__ == "__main__":
    # NER_FF_NN(input_size=32, hidden_size=[64, 48], output_size=16)
    input_size = 32
    hidden_sizes = [64, 48]
    output_size = 16
    batch = 32   # small demo batch; wrapper handles tile selection / ragged blocks

    key = jax.random.PRNGKey(0)
    key, kx = jax.random.split(key)
    x = jax.random.normal(kx, (batch, input_size), jnp.float32)
    params = init_params(key, input_size, hidden_sizes, output_size)

    # f32 path (exact)
    out = ner_ff_nn_forward(x, params)
    out = jax.block_until_ready(out)
    ref = reference_forward(x, params)
    assert out.shape == (batch, output_size)
    assert jnp.allclose(out, ref, atol=1e-4, rtol=1e-4), "mismatch vs reference"

    # Non-tile-aligned batch -> exercises the ragged last grid block.
    x2 = jax.random.normal(key, (batch + 5, input_size), jnp.float32)
    out2 = jax.block_until_ready(ner_ff_nn_forward(x2, params))
    ref2 = reference_forward(x2, params)
    assert out2.shape == (batch + 5, output_size)
    assert jnp.allclose(out2, ref2, atol=1e-4, rtol=1e-4), "mismatch (ragged B)"

    # bf16 operand path (recommended on v6e/v7x); looser tolerance expected.
    out3 = jax.block_until_ready(
        ner_ff_nn_forward(x, params, compute_dtype=jnp.bfloat16))
    assert out3.shape == (batch, output_size)
    assert jnp.all(jnp.isfinite(out3))
    assert float(jnp.max(jnp.abs(out3 - ref))) < 1e-1, "bf16 path too far off"

    print("KERNEL_OK")
</pallas_src>

<mosaic_0001>
module attributes {stable_mosaic.version = 11 : i64} {
  func.func @_mlp_kernel(%arg0: i32, %arg1: memref<8x32xf32, #tpu.memory_space<vmem>>, %arg2: memref<32x128xf32, #tpu.memory_space<vmem>>, %arg3: memref<1x128xf32, #tpu.memory_space<vmem>>, %arg4: memref<128x128xf32, #tpu.memory_space<vmem>>, %arg5: memref<1x128xf32, #tpu.memory_space<vmem>>, %arg6: memref<128x16xf32, #tpu.memory_space<vmem>>, %arg7: memref<1x16xf32, #tpu.memory_space<vmem>>, %arg8: memref<8x16xf32, #tpu.memory_space<vmem>>) attributes {dimension_semantics = [#tpu.dimension_semantics<parallel>], iteration_bounds = array<i64: 4>, scalar_prefetch = 0 : i64, scratch_operands = 0 : i64, tpu.core_type = #tpu.core_type<tc>, window_params = [{transform_indices = @transform_0, window_bounds = array<i64: 8, 32>}, {pipeline_mode = #tpu.pipeline_mode<synchronous>, transform_indices = @transform_1, window_bounds = array<i64: 32, 128>}, {pipeline_mode = #tpu.pipeline_mode<synchronous>, transform_indices = @transform_2, window_bounds = array<i64: 1, 128>}, {pipeline_mode = #tpu.pipeline_mode<synchronous>, transform_indices = @transform_3, window_bounds = array<i64: 128, 128>}, {pipeline_mode = #tpu.pipeline_mode<synchronous>, transform_indices = @transform_4, window_bounds = array<i64: 1, 128>}, {pipeline_mode = #tpu.pipeline_mode<synchronous>, transform_indices = @transform_5, window_bounds = array<i64: 128, 16>}, {pipeline_mode = #tpu.pipeline_mode<synchronous>, transform_indices = @transform_6, window_bounds = array<i64: 1, 16>}, {transform_indices = @transform_7, window_bounds = array<i64: 8, 16>}]} {
    %c0 = arith.constant 0 : index
    %c0_0 = arith.constant 0 : index
    %0 = vector.load %arg1[%c0, %c0_0] : memref<8x32xf32, #tpu.memory_space<vmem>>, vector<8x32xf32>
    %c0_1 = arith.constant 0 : index
    %c0_2 = arith.constant 0 : index
    %1 = vector.load %arg2[%c0_1, %c0_2] : memref<32x128xf32, #tpu.memory_space<vmem>>, vector<32x128xf32>
    %cst = arith.constant dense<0.000000e+00> : vector<8x128xf32>
    %2 = tpu.matmul %0, %1, %cst {dimension_numbers = #tpu.dot_dimension_numbers<[1], [0], [0], [1], [0, 0, 1, 1], [], []>} : vector<8x32xf32>, vector<32x128xf32>, vector<8x128xf32> -> vector<8x128xf32>
    %c0_3 = arith.constant 0 : index
    %c0_4 = arith.constant 0 : index
    %3 = vector.load %arg3[%c0_3, %c0_4] : memref<1x128xf32, #tpu.memory_space<vmem>>, vector<1x128xf32>
    %4 = vector.broadcast %3 : vector<1x128xf32> to vector<8x128xf32>
    %5 = arith.addf %2, %4 : vector<8x128xf32>
    %cst_5 = arith.constant 0.000000e+00 : f32
    %6 = vector.broadcast %cst_5 : f32 to vector<8x128xf32>
    %7 = arith.maximumf %5, %6 : vector<8x128xf32>
    %c0_6 = arith.constant 0 : index
    %c0_7 = arith.constant 0 : index
    %8 = vector.load %arg4[%c0_6, %c0_7] : memref<128x128xf32, #tpu.memory_space<vmem>>, vector<128x128xf32>
    %cst_8 = arith.constant dense<0.000000e+00> : vector<8x128xf32>
    %9 = tpu.matmul %7, %8, %cst_8 {dimension_numbers = #tpu.dot_dimension_numbers<[1], [0], [0], [1], [0, 0, 1, 1], [], []>} : vector<8x128xf32>, vector<128x128xf32>, vector<8x128xf32> -> vector<8x128xf32>
    %c0_9 = arith.constant 0 : index
    %c0_10 = arith.constant 0 : index
    %10 = vector.load %arg5[%c0_9, %c0_10] : memref<1x128xf32, #tpu.memory_space<vmem>>, vector<1x128xf32>
    %11 = vector.broadcast %10 : vector<1x128xf32> to vector<8x128xf32>
    %12 = arith.addf %9, %11 : vector<8x128xf32>
    %cst_11 = arith.constant 0.000000e+00 : f32
    %13 = vector.broadcast %cst_11 : f32 to vector<8x128xf32>
    %14 = arith.maximumf %12, %13 : vector<8x128xf32>
    %c0_12 = arith.constant 0 : index
    %c0_13 = arith.constant 0 : index
    %15 = vector.load %arg6[%c0_12, %c0_13] : memref<128x16xf32, #tpu.memory_space<vmem>>, vector<128x16xf32>
    %cst_14 = arith.constant dense<0.000000e+00> : vector<8x16xf32>
    %16 = tpu.matmul %14, %15, %cst_14 {dimension_numbers = #tpu.dot_dimension_numbers<[1], [0], [0], [1], [0, 0, 1, 1], [], []>} : vector<8x128xf32>, vector<128x16xf32>, vector<8x16xf32> -> vector<8x16xf32>
    %c0_15 = arith.constant 0 : index
    %c0_16 = arith.constant 0 : index
    %17 = vector.load %arg7[%c0_15, %c0_16] : memref<1x16xf32, #tpu.memory_space<vmem>>, vector<1x16xf32>
    %18 = vector.broadcast %17 : vector<1x16xf32> to vector<8x16xf32>
    %19 = arith.addf %16, %18 : vector<8x16xf32>
    %c0_17 = arith.constant 0 : index
    %c0_18 = arith.constant 0 : index
    %20 = vector.load %arg8[%c0_17, %c0_18] : memref<8x16xf32, #tpu.memory_space<vmem>>, vector<8x16xf32>
    tpu.vector_store %arg8[%c0_17, %c0_18], %19 {strides = array<i32>} : memref<8x16xf32, #tpu.memory_space<vmem>>, vector<8x16xf32>,
    return
  }
  func.func @transform_0(%arg0: i32) -> (i32, i32) {
    %c0_i32 = arith.constant 0 : i32
    %c0_i32_0 = arith.constant 0 : i32
    return %arg0, %c0_i32 : i32, i32
  }
  func.func @transform_1(%arg0: i32) -> (i32, i32) {
    %c0_i32 = arith.constant 0 : i32
    %c0_i32_0 = arith.constant 0 : i32
    %c0_i32_1 = arith.constant 0 : i32
    return %c0_i32, %c0_i32_0 : i32, i32
  }
  func.func @transform_2(%arg0: i32) -> (i32, i32) {
    %c0_i32 = arith.constant 0 : i32
    %c0_i32_0 = arith.constant 0 : i32
    %c0_i32_1 = arith.constant 0 : i32
    return %c0_i32, %c0_i32_0 : i32, i32
  }
  func.func @transform_3(%arg0: i32) -> (i32, i32) {
    %c0_i32 = arith.constant 0 : i32
    %c0_i32_0 = arith.constant 0 : i32
    %c0_i32_1 = arith.constant 0 : i32
    return %c0_i32, %c0_i32_0 : i32, i32
  }
  func.func @transform_4(%arg0: i32) -> (i32, i32) {
    %c0_i32 = arith.constant 0 : i32
    %c0_i32_0 = arith.constant 0 : i32
    %c0_i32_1 = arith.constant 0 : i32
    return %c0_i32, %c0_i32_0 : i32, i32
  }
  func.func @transform_5(%arg0: i32) -> (i32, i32) {
    %c0_i32 = arith.constant 0 : i32
    %c0_i32_0 = arith.constant 0 : i32
    %c0_i32_1 = arith.constant 0 : i32
    return %c0_i32, %c0_i32_0 : i32, i32
  }
  func.func @transform_6(%arg0: i32) -> (i32, i32) {
    %c0_i32 = arith.constant 0 : i32
    %c0_i32_0 = arith.constant 0 : i32
    %c0_i32_1 = arith.constant 0 : i32
    return %c0_i32, %c0_i32_0 : i32, i32
  }
  func.func @transform_7(%arg0: i32) -> (i32, i32) {
    %c0_i32 = arith.constant 0 : i32
    %c0_i32_0 = arith.constant 0 : i32
    return %arg0, %c0_i32 : i32, i32
  }
}

</mosaic_0001>

<llo_original>
// kernel: tpu_custom_call.1
$region0: #{tpu_custom_call.1}
  #allocation0 [shape = 'u32[]', space=smem, size = 0x4, offset = 0x4, fixed_abs, tag = 'smem constant byte address 0x4 - core index']
  #allocation1 [shape = 'u32[144,128]{1,0:T(1,128)}', space=vmem, size = 0x12000, scoped, tag = 'internal scratch']
  %s0 = inlined_call_operand.hbm [shape: f32[32,32], index: 0, kind: input, shape index: {}]
  %s1 = inlined_call_operand.hbm [shape: f32[32,128], index: 1, kind: input, shape index: {}]
  %s2 = inlined_call_operand.vmem [shape: f32[1,128], index: 2, kind: input, shape index: {}]
  %s3 = inlined_call_operand.vmem [shape: f32[128,128], index: 3, kind: input, shape index: {}]
  %s4 = inlined_call_operand.vmem [shape: f32[1,128], index: 4, kind: input, shape index: {}]
  %s5 = inlined_call_operand.vmem [shape: f32[128,16], index: 5, kind: input, shape index: {}]
  %s6 = inlined_call_operand.vmem [shape: f32[1,16], index: 6, kind: input, shape index: {}]
  %s7 = inlined_call_operand.vmem [shape: f32[32,16], index: 7, kind: output, shape index: {}]
  %s8 = sld [smem:[#allocation0]]
  $region69: #{tpu_custom_call.1} parent=0
    _
  %s10 = ssub.s32 1, %s8
  %s11 = scalar_select 0, %s10, %s8
  $region1: #{tpu_custom_call.1} parent=0
    #allocation2 [shape = 'u8[8192]{0}', space=vmem, size = 0x2000, scoped, tag = 'input window, operand 0']
    #allocation3 [shape = 's32[2]{0}', space=sflag, size = 0x8, scoped, tag = 'scoped memory for tpu_custom_call.1']
    #allocation4 [shape = 'u8[16384]{0}', space=vmem, size = 0x4000, scoped, tag = 'input window, operand 1, single buffered']
    #allocation5 [shape = 's32[1]{0}', space=sflag, size = 0x4, scoped, tag = 'scoped memory for tpu_custom_call.1']
    %12 = vsyncpa [#allocation3], 0
    %s13 = scalar_lea.sflag [#allocation3], 1
    %14 = vsyncpa %s13, 0
    %15 = vsyncpa [#allocation5], 0
    loop: start=0, step=1, limit=6
    $region2: #{tpu_custom_call.1} parent=1 // loop_pre_header
      _
    $region3: #{tpu_custom_call.1} parent=1 // loop_header
      %s17 = sphi 0, %s21
      %p18 = scmp.ge.s32.totalorder %s17, 6
      %s27 = sphi 0, %s29
      %s30 = sphi 0, %s27
      %s31 = sphi 0, %s30
      %s47 = sphi 0, %s31
      %s51 = sphi 0, %s51
      %s53 = sphi 0, %s51
      %s54 = sphi 0, %s53
      %s68 = sphi 0, %s54
      %s72 = sphi 0, %s72
      %s74 = sphi 0, %s72
      %s75 = sphi 0, %s74
      %s89 = sphi 0, %s75
      %s93 = sphi 0, %s93
      %s95 = sphi 0, %s93
      %s96 = sphi 0, %s95
      %s110 = sphi 0, %s96
      %s114 = sphi 0, %s114
      %s116 = sphi 0, %s114
      %s117 = sphi 0, %s116
      %s131 = sphi 0, %s117
      %s135 = sphi 0, %s135
      %s137 = sphi 0, %s135
      %s138 = sphi 0, %s137
      %s152 = sphi 0, %s138
      %s156 = sphi 0, %s156
      %s158 = sphi 0, %s156
      %s159 = sphi 0, %s158
      %s173 = sphi 0, %s159
      %s179 = sphi 0, %s181
      %s182 = sphi 0, %s179
      %s183 = sphi 0, %s182
      %s199 = sphi 0, %s183
    $region4: #{tpu_custom_call.1} parent=1 // loop_header_branch
      %20 = sbr.rel (%p18) target = $region8
    $region5: #{tpu_custom_call.1} parent=1 // loop_body
      %s22 = ssub.s32 %s17, 1
      %s23 = ssub.s32 %s17, 2
      %s24 = sadd.s32 %s17, 1
      %s25 = ssub.s32 %s17, %s24
      %p26 = scmp.eq.s32.totalorder %s25, 0
      %s28 = sadd.s32 %s27, 1
      %s29 = scalar_select %p26, %s27, %s28
      %p32 = pneg %p26
      %p33 = scmp.eq.s32.totalorder %s17, 3
      %p34 = por %p32, %p33
      %p35 = scmp.ne.s32.totalorder %s27, %s30
      %p36 = scmp.eq.s32.totalorder %s17, 0
      %p37 = por %p35, %p36
      %p38 = scmp.ne.s32.totalorder %s27, %s30
      %p39 = scmp.eq.s32.totalorder %s22, 3
      %p40 = por %p38, %p39
      %p41 = scmp.ne.s32.totalorder %s30, %s31
      %p42 = scmp.eq.s32.totalorder %s22, 0
      %p43 = por %p41, %p42
      %p44 = scmp.ne.s32.totalorder %s30, %s31
      %p45 = scmp.eq.s32.totalorder %s23, 3
      %p46 = por %p44, %p45
      %p48 = scmp.ne.s32.totalorder %s31, %s47
      %p49 = scmp.eq.s32.totalorder %s23, 0
      %p50 = por %p48, %p49
      %s52 = sadd.s32 %s51, 1
      %p55 = scmp.eq.s32.totalorder %s17, 3
      %p56 = scmp.ne.s32.totalorder %s51, %s53
      %p57 = scmp.eq.s32.totalorder %s17, 0
      %p58 = por %p56, %p57
      %p59 = scmp.ne.s32.totalorder %s51, %s53
      %p60 = scmp.eq.s32.totalorder %s22, 3
      %p61 = por %p59, %p60
      %p62 = scmp.ne.s32.totalorder %s53, %s54
      %p63 = scmp.eq.s32.totalorder %s22, 0
      %p64 = por %p62, %p63
      %p65 = scmp.ne.s32.totalorder %s53, %s54
      %p66 = scmp.eq.s32.totalorder %s23, 3
      %p67 = por %p65, %p66
      %p69 = scmp.ne.s32.totalorder %s54, %s68
      %p70 = scmp.eq.s32.totalorder %s23, 0
      %p71 = por %p69, %p70
      %s73 = sadd.s32 %s72, 1
      %p76 = scmp.eq.s32.totalorder %s17, 3
      %p77 = scmp.ne.s32.totalorder %s72, %s74
      %p78 = scmp.eq.s32.totalorder %s17, 0
      %p79 = por %p77, %p78
      %p80 = scmp.ne.s32.totalorder %s72, %s74
      %p81 = scmp.eq.s32.totalorder %s22, 3
      %p82 = por %p80, %p81
      %p83 = scmp.ne.s32.totalorder %s74, %s75
      %p84 = scmp.eq.s32.totalorder %s22, 0
      %p85 = por %p83, %p84
      %p86 = scmp.ne.s32.totalorder %s74, %s75
      %p87 = scmp.eq.s32.totalorder %s23, 3
      %p88 = por %p86, %p87
      %p90 = scmp.ne.s32.totalorder %s75, %s89
      %p91 = scmp.eq.s32.totalorder %s23, 0
      %p92 = por %p90, %p91
      %s94 = sadd.s32 %s93, 1
      %p97 = scmp.eq.s32.totalorder %s17, 3
      %p98 = scmp.ne.s32.totalorder %s93, %s95
      %p99 = scmp.eq.s32.totalorder %s17, 0
      %p100 = por %p98, %p99
      %p101 = scmp.ne.s32.totalorder %s93, %s95
      %p102 = scmp.eq.s32.totalorder %s22, 3
      %p103 = por %p101, %p102
      %p104 = scmp.ne.s32.totalorder %s95, %s96
      %p105 = scmp.eq.s32.totalorder %s22, 0
      %p106 = por %p104, %p105
      %p107 = scmp.ne.s32.totalorder %s95, %s96
      %p108 = scmp.eq.s32.totalorder %s23, 3
      %p109 = por %p107, %p108
      %p111 = scmp.ne.s32.totalorder %s96, %s110
      %p112 = scmp.eq.s32.totalorder %s23, 0
      %p113 = por %p111, %p112
      %s115 = sadd.s32 %s114, 1
      %p118 = scmp.eq.s32.totalorder %s17, 3
      %p119 = scmp.ne.s32.totalorder %s114, %s116
      %p120 = scmp.eq.s32.totalorder %s17, 0
      %p121 = por %p119, %p120
      %p122 = scmp.ne.s32.totalorder %s114, %s116
      %p123 = scmp.eq.s32.totalorder %s22, 3
      %p124 = por %p122, %p123
      %p125 = scmp.ne.s32.totalorder %s116, %s117
      %p126 = scmp.eq.s32.totalorder %s22, 0
      %p127 = por %p125, %p126
      %p128 = scmp.ne.s32.totalorder %s116, %s117
      %p129 = scmp.eq.s32.totalorder %s23, 3
      %p130 = por %p128, %p129
      %p132 = scmp.ne.s32.totalorder %s117, %s131
      %p133 = scmp.eq.s32.totalorder %s23, 0
      %p134 = por %p132, %p133
      %s136 = sadd.s32 %s135, 1
      %p139 = scmp.eq.s32.totalorder %s17, 3
      %p140 = scmp.ne.s32.totalorder %s135, %s137
      %p141 = scmp.eq.s32.totalorder %s17, 0
      %p142 = por %p140, %p141
      %p143 = scmp.ne.s32.totalorder %s135, %s137
      %p144 = scmp.eq.s32.totalorder %s22, 3
      %p145 = por %p143, %p144
      %p146 = scmp.ne.s32.totalorder %s137, %s138
      %p147 = scmp.eq.s32.totalorder %s22, 0
      %p148 = por %p146, %p147
      %p149 = scmp.ne.s32.totalorder %s137, %s138
      %p150 = scmp.eq.s32.totalorder %s23, 3
      %p151 = por %p149, %p150
      %p153 = scmp.ne.s32.totalorder %s138, %s152
      %p154 = scmp.eq.s32.totalorder %s23, 0
      %p155 = por %p153, %p154
      %s157 = sadd.s32 %s156, 1
      %p160 = scmp.eq.s32.totalorder %s17, 3
      %p161 = scmp.ne.s32.totalorder %s156, %s158
      %p162 = scmp.eq.s32.totalorder %s17, 0
      %p163 = por %p161, %p162
      %p164 = scmp.ne.s32.totalorder %s156, %s158
      %p165 = scmp.eq.s32.totalorder %s22, 3
      %p166 = por %p164, %p165
      %p167 = scmp.ne.s32.totalorder %s158, %s159
      %p168 = scmp.eq.s32.totalorder %s22, 0
      %p169 = por %p167, %p168
      %p170 = scmp.ne.s32.totalorder %s158, %s159
      %p171 = scmp.eq.s32.totalorder %s23, 3
      %p172 = por %p170, %p171
      %p174 = scmp.ne.s32.totalorder %s159, %s173
      %p175 = scmp.eq.s32.totalorder %s23, 0
      %p176 = por %p174, %p175
      %s177 = ssub.s32 %s17, %s24
      %p178 = scmp.eq.s32.totalorder %s177, 0
      %s180 = sadd.s32 %s179, 1
      %s181 = scalar_select %p178, %s179, %s180
      %p184 = pneg %p178
      %p185 = scmp.eq.s32.totalorder %s17, 3
      %p186 = por %p184, %p185
      %p187 = scmp.ne.s32.totalorder %s179, %s182
      %p188 = scmp.eq.s32.totalorder %s17, 0
      %p189 = por %p187, %p188
      %p190 = scmp.ne.s32.totalorder %s179, %s182
      %p191 = scmp.eq.s32.totalorder %s22, 3
      %p192 = por %p190, %p191
      %p193 = scmp.ne.s32.totalorder %s182, %s183
      %p194 = scmp.eq.s32.totalorder %s22, 0
      %p195 = por %p193, %p194
      %p196 = scmp.ne.s32.totalorder %s182, %s183
      %p197 = scmp.eq.s32.totalorder %s23, 3
      %p198 = por %p196, %p197
      %p200 = scmp.ne.s32.totalorder %s183, %s199
      %p201 = scmp.eq.s32.totalorder %s23, 0
      %p202 = por %p200, %p201
      %p203 = scmp.le.s32.totalorder 1, %s17
      %p204 = scmp.lt.s32.totalorder %s17, 5
      %p205 = pnand %p203, %p204
      %p206 = pneg %p205
      // Predicated region
      $region9: #{tpu_custom_call.1} parent=5 // pred_check
        _
      $region10: #{tpu_custom_call.1} parent=5 // pred_check_branch
        %208 = sbr.rel (%p205) target = $region12
      $region11: #{tpu_custom_call.1} parent=5 // pred_region
        %s209 = ssub.s32 %s17, 1
        // Predicated region
        $region13: #{tpu_custom_call.1} parent=11 // pred_check
          %p210 = pneg %p64
        $region14: #{tpu_custom_call.1} parent=11 // pred_check_branch
          %212 = sbr.rel (%p210) target = $region16
        $region15: #{tpu_custom_call.1} parent=11 // pred_region
          %s214 = ssub.s32 512, 512
          %215 = vsyncadd [#allocation5], %s214
          %s216 = sshll.u32 [#allocation4], 4
          %s217 = int_to_ptr.vmem [resolvable:$true] %s216
          %222 = dma.hbm_to_vmem [thread:$0]  %s1, 512, %s217, [#allocation5], 128, 128, 8
        $region16: #{tpu_custom_call.1} parent=11 // pred_fallthru
          _
        // Predicated region
        $region17: #{tpu_custom_call.1} parent=11 // pred_check
          %p223 = pneg %p85
        $region18: #{tpu_custom_call.1} parent=11 // pred_check_branch
          %225 = sbr.rel (%p223) target = $region20
        $region19: #{tpu_custom_call.1} parent=11 // pred_region
          _
        $region20: #{tpu_custom_call.1} parent=11 // pred_fallthru
          _
        // Predicated region
        $region21: #{tpu_custom_call.1} parent=11 // pred_check
          %p226 = pneg %p106
        $region22: #{tpu_custom_call.1} parent=11 // pred_check_branch
          %228 = sbr.rel (%p226) target = $region24
        $region23: #{tpu_custom_call.1} parent=11 // pred_region
          _
        $region24: #{tpu_custom_call.1} parent=11 // pred_fallthru
          _
        // Predicated region
        $region25: #{tpu_custom_call.1} parent=11 // pred_check
          %p229 = pneg %p127
        $region26: #{tpu_custom_call.1} parent=11 // pred_check_branch
          %231 = sbr.rel (%p229) target = $region28
        $region27: #{tpu_custom_call.1} parent=11 // pred_region
          _
        $region28: #{tpu_custom_call.1} parent=11 // pred_fallthru
          _
        // Predicated region
        $region29: #{tpu_custom_call.1} parent=11 // pred_check
          %p232 = pneg %p148
        $region30: #{tpu_custom_call.1} parent=11 // pred_check_branch
          %234 = sbr.rel (%p232) target = $region32
        $region31: #{tpu_custom_call.1} parent=11 // pred_region
          _
        $region32: #{tpu_custom_call.1} parent=11 // pred_fallthru
          _
        // Predicated region
        $region33: #{tpu_custom_call.1} parent=11 // pred_check
          %p235 = pneg %p169
        $region34: #{tpu_custom_call.1} parent=11 // pred_check_branch
          %237 = sbr.rel (%p235) target = $region36
        $region35: #{tpu_custom_call.1} parent=11 // pred_region
          _
        $region36: #{tpu_custom_call.1} parent=11 // pred_fallthru
          _
      $region12: #{tpu_custom_call.1} parent=5 // pred_fallthru
        _
      %p238 = scmp.lt.s32.totalorder %s17, 4
      // Predicated region
      $region37: #{tpu_custom_call.1} parent=5 // pred_check
        %p239 = pneg %p238
      $region38: #{tpu_custom_call.1} parent=5 // pred_check_branch
        %241 = sbr.rel (%p239) target = $region40
      $region39: #{tpu_custom_call.1} parent=5 // pred_region
        // Predicated region
        $region41: #{tpu_custom_call.1} parent=39 // pred_check
          %p242 = pneg %p37
        $region42: #{tpu_custom_call.1} parent=39 // pred_check_branch
          %244 = sbr.rel (%p242) target = $region44
        $region43: #{tpu_custom_call.1} parent=39 // pred_region
          %s245 = sand.u32 %s27, 1
          %s246 = scalar_lea.sflag [#allocation3], %s245
          %s247 = sand.u32 %s27, 1
          %s248 = smul.addr %s247, 8
          %s249 = scalar_lea.vmem [#allocation2], %s248
          %s251 = ssub.s32 128, 128
          %252 = vsyncadd %s246, %s251
          %s253 = smul.addr %s17, 128
          %s254 = scalar_lea.hbm %s0, %s253
          %s256 = sshll.u32 %s249, 4
          %s257 = int_to_ptr.vmem [resolvable:$true] %s256
          %259 = dma.hbm_to_vmem [thread:$0]  %s254, 128, %s257, %s246
        $region44: #{tpu_custom_call.1} parent=39 // pred_fallthru
          _
      $region40: #{tpu_custom_call.1} parent=5 // pred_fallthru
        _
      %p260 = scmp.le.s32.totalorder 1, %s17
      %p261 = scmp.lt.s32.totalorder %s17, 5
      %p262 = pnand %p260, %p261
      %p263 = pneg %p262
      // Predicated region
      $region45: #{tpu_custom_call.1} parent=5 // pred_check
        _
      $region46: #{tpu_custom_call.1} parent=5 // pred_check_branch
        %265 = sbr.rel (%p262) target = $region48
      $region47: #{tpu_custom_call.1} parent=5 // pred_region
        %s266 = ssub.s32 %s17, 1
        %s267 = sand.u32 %s30, 1
        %s268 = scalar_lea.sflag [#allocation3], %s267
        %s269 = sand.u32 %s30, 1
        %s270 = smul.addr %s269, 8
        %s271 = scalar_lea.vmem [#allocation2], %s270
        // Predicated region
        $region49: #{tpu_custom_call.1} parent=47 // pred_check
          %p272 = pneg %p43
        $region50: #{tpu_custom_call.1} parent=47 // pred_check_branch
          %274 = sbr.rel (%p272) target = $region52
        $region51: #{tpu_custom_call.1} parent=47 // pred_region
          %275 = dma.done %s268, 128
        $region52: #{tpu_custom_call.1} parent=47 // pred_fallthru
          _
        // Predicated region
        $region53: #{tpu_custom_call.1} parent=47 // pred_check
          %p276 = pneg %p64
        $region54: #{tpu_custom_call.1} parent=47 // pred_check_branch
          %278 = sbr.rel (%p276) target = $region56
        $region55: #{tpu_custom_call.1} parent=47 // pred_region
          %279 = dma.done [#allocation5], 512
        $region56: #{tpu_custom_call.1} parent=47 // pred_fallthru
          _
        %s280 = sand.u32 %s30, 1
        %s281 = scalar_lea.sflag [#allocation3], %s280
        %s282 = sand.u32 %s30, 1
        %s283 = smul.addr %s282, 8
        %s284 = scalar_lea.vmem [#allocation2], %s283
        %p285 = pneg %p43
        %p286 = pneg %p40
        %p287 = pneg %p64
        %p288 = pneg %p61
        %p289 = pneg %p85
        %p290 = pneg %p82
        %p291 = pneg %p106
        %p292 = pneg %p103
        %p293 = pneg %p127
        %p294 = pneg %p124
        %p295 = pneg %p148
        %p296 = pneg %p145
        %p297 = pneg %p169
        %p298 = pneg %p166
        %p299 = pneg %p195
        %p300 = pneg %p192
        %p301 = scmp.lt.s32.totalorder %s22, 3
        %s302 = scalar_select %p301, %s22, 3
        %s303 = smul.addr %s302, 8
        %s304 = scalar_lea.vmem %s7, %s303
        %p305 = scmp.lt.s32.totalorder %s22, 3
        %s306 = scalar_select %p305, %s22, 3
        %s307 = smul.addr %s306, 8
        %s308 = scalar_lea.vmem %s7, %s307
        %v309 = vld [vmem:[%s271] sm:$0xff]
        %v310 = vld [vmem:[#allocation4] sm:$0xff]
        %v311 = vld [vmem:[#allocation4 + $0x8] sm:$0xff]
        %v312 = vld [vmem:[#allocation4 + $0x10] sm:$0xff]
        %v313 = vld [vmem:[#allocation4 + $0x18] sm:$0xff]
        %v314 = vld [vmem:[%s2] sm:$0x1]
        %v316 = vlaneseq
        %v317 = vshrl.u32 %v316, 7
        %v318 = vsub.s32 0, %v317
        %v319 = vrot.slane %v314, %v318
        %vm321 = vcmask 261120
        %v323 = vsel %vm321, %v309, 0
        %325 = vmatprep.subr.mxu0 0.0
        %326 = vmatpush1.msra.mxu0 %v310
        %327 = vmatprep.subr.mxu0 0.0
        %328 = vmatpush1.msra.mxu0 %v311
        %329 = vmatprep.subr.mxu0 0.0
        %330 = vmatpush1.msra.mxu0 %v312
        %331 = vmatprep.subr.mxu0 0.0
        %332 = vmatpush1.msra.mxu0 %v313
        %333 = vmatprep.subr.mxu0 0.0
        %334 = vmatpush1.msra.mxu0 0.0
        %335 = vmatprep.subr.mxu0 0.0
        %336 = vmatpush1.msra.mxu0 0.0
        %337 = vmatprep.subr.mxu0 0.0
        %338 = vmatpush1.msra.mxu0 0.0
        %339 = vmatprep.subr.mxu0 0.0
        %340 = vmatpush1.msra.mxu0 0.0
        %341 = vmatprep.subr.mxu0 0.0
        %342 = vmatpush1.msra.mxu0 0.0
        %343 = vmatprep.subr.mxu0 0.0
        %344 = vmatpush1.msra.mxu0 0.0
        %345 = vmatprep.subr.mxu0 0.0
        %346 = vmatpush1.msra.mxu0 0.0
        %347 = vmatprep.subr.mxu0 0.0
        %348 = vmatpush1.msra.mxu0 0.0
        %349 = vmatprep.subr.mxu0 0.0
        %350 = vmatpush1.msra.mxu0 0.0
        %351 = vmatprep.subr.mxu0 0.0
        %352 = vmatpush1.msra.mxu0 0.0
        %353 = vmatprep.subr.mxu0 0.0
        %354 = vmatpush1.msra.mxu0 0.0
        %355 = vmatprep.subr.mxu0 0.0
        %356 = vmatpush1.msra.mxu0 0.0
        %357 = vmatprep.subr.mxu0 0.0
        %358 = vmatpush1.msra.mxu0 0.0
        %359 = vmatprep.subr.mxu0 0.0
        %360 = vmatpush1.msra.mxu0 0.0
        %361 = vmatprep.subr.mxu0 0.0
        %362 = vmatpush1.msra.mxu0 0.0
        %363 = vmatprep.subr.mxu0 0.0
        %364 = vmatpush1.msra.mxu0 0.0
        %365 = vmatprep.subr.mxu0 0.0
        %366 = vmatpush1.msra.mxu0 0.0
        %367 = vmatprep.subr.mxu0 0.0
        %368 = vmatpush1.msra.mxu0 0.0
        %369 = vmatprep.subr.mxu0 0.0
        %370 = vmatpush1.msra.mxu0 0.0
        %371 = vmatprep.subr.mxu0 0.0
        %372 = vmatpush1.msra.mxu0 0.0
        %373 = vmatprep.subr.mxu0 0.0
        %374 = vmatpush1.msra.mxu0 0.0
        %375 = vmatprep.subr.mxu0 0.0
        %376 = vmatpush1.msra.mxu0 0.0
        %377 = vmatprep.subr.mxu0 0.0
        %378 = vmatpush1.msra.mxu0 0.0
        %379 = vmatprep.subr.mxu0 0.0
        %380 = vmatpush1.msra.mxu0 0.0
        %381 = vmatprep.subr.mxu0 0.0
        %382 = vmatpush1.msra.mxu0 0.0
        %383 = vmatprep.subr.mxu0 0.0
        %384 = vmatpush1.msra.mxu0 0.0
        %385 = vmatprep.subr.mxu0 0.0
        %386 = vmatpush1.msra.mxu0 0.0
        %387 = vmatprep.subr.mxu0 0.0
        %388 = vmatpush1.msra.mxu0 0.0
        %389 = vmatprep.mubr.f32.mxu0 0.0
        %390 = vmatmul.mubr.f32.gmra.mrb[0].mxu0 %v323
        %v391 = vpop.f32.mrb[0].mxu0
        %v392 = vadd.f32 %v319, %v391
        %v393 = vpop.f32.mrb[0].mxu0
        %394 = vdwg.mxu0
        %v395 = vmax.f32 %v392, 0.0
        %v396 = vld [vmem:[%s3] sm:$0xff]
        %v397 = vld [vmem:[%s3 + $0x8] sm:$0xff]
        %v398 = vld [vmem:[%s3 + $0x10] sm:$0xff]
        %v399 = vld [vmem:[%s3 + $0x18] sm:$0xff]
        %v400 = vld [vmem:[%s3 + $0x20] sm:$0xff]
        %v401 = vld [vmem:[%s3 + $0x28] sm:$0xff]
        %v402 = vld [vmem:[%s3 + $0x30] sm:$0xff]
        %v403 = vld [vmem:[%s3 + $0x38] sm:$0xff]
        %v404 = vld [vmem:[%s3 + $0x40] sm:$0xff]
        %v405 = vld [vmem:[%s3 + $0x48] sm:$0xff]
        %v406 = vld [vmem:[%s3 + $0x50] sm:$0xff]
        %v407 = vld [vmem:[%s3 + $0x58] sm:$0xff]
        %v408 = vld [vmem:[%s3 + $0x60] sm:$0xff]
        %v409 = vld [vmem:[%s3 + $0x68] sm:$0xff]
        %v410 = vld [vmem:[%s3 + $0x70] sm:$0xff]
        %v411 = vld [vmem:[%s3 + $0x78] sm:$0xff]
        %v412 = vld [vmem:[%s4] sm:$0x1]
        %v414 = vlaneseq
        %v415 = vshrl.u32 %v414, 7
        %v416 = vsub.s32 0, %v415
        %v417 = vrot.slane %v412, %v416
        %419 = vmatprep.subr.mxu0 0.0
        %420 = vmatpush1.msra.mxu0 %v396
        %421 = vmatprep.subr.mxu0 0.0
        %422 = vmatpush1.msra.mxu0 %v397
        %423 = vmatprep.subr.mxu0 0.0
        %424 = vmatpush1.msra.mxu0 %v398
        %425 = vmatprep.subr.mxu0 0.0
        %426 = vmatpush1.msra.mxu0 %v399
        %427 = vmatprep.subr.mxu0 0.0
        %428 = vmatpush1.msra.mxu0 %v400
        %429 = vmatprep.subr.mxu0 0.0
        %430 = vmatpush1.msra.mxu0 %v401
        %431 = vmatprep.subr.mxu0 0.0
        %432 = vmatpush1.msra.mxu0 %v402
        %433 = vmatprep.subr.mxu0 0.0
        %434 = vmatpush1.msra.mxu0 %v403
        %435 = vmatprep.subr.mxu0 0.0
        %436 = vmatpush1.msra.mxu0 %v404
        %437 = vmatprep.subr.mxu0 0.0
        %438 = vmatpush1.msra.mxu0 %v405
        %439 = vmatprep.subr.mxu0 0.0
        %440 = vmatpush1.msra.mxu0 %v406
        %441 = vmatprep.subr.mxu0 0.0
        %442 = vmatpush1.msra.mxu0 %v407
        %443 = vmatprep.subr.mxu0 0.0
        %444 = vmatpush1.msra.mxu0 %v408
        %445 = vmatprep.subr.mxu0 0.0
        %446 = vmatpush1.msra.mxu0 %v409
        %447 = vmatprep.subr.mxu0 0.0
        %448 = vmatpush1.msra.mxu0 %v410
        %449 = vmatprep.subr.mxu0 0.0
        %450 = vmatpush1.msra.mxu0 %v411
        %451 = vmatprep.subr.mxu0 0.0
        %452 = vmatpush1.msra.mxu0 0.0
        %453 = vmatprep.subr.mxu0 0.0
        %454 = vmatpush1.msra.mxu0 0.0
        %455 = vmatprep.subr.mxu0 0.0
        %456 = vmatpush1.msra.mxu0 0.0
        %457 = vmatprep.subr.mxu0 0.0
        %458 = vmatpush1.msra.mxu0 0.0
        %459 = vmatprep.subr.mxu0 0.0
        %460 = vmatpush1.msra.mxu0 0.0
        %461 = vmatprep.subr.mxu0 0.0
        %462 = vmatpush1.msra.mxu0 0.0
        %463 = vmatprep.subr.mxu0 0.0
        %464 = vmatpush1.msra.mxu0 0.0
        %465 = vmatprep.subr.mxu0 0.0
        %466 = vmatpush1.msra.mxu0 0.0
        %467 = vmatprep.subr.mxu0 0.0
        %468 = vmatpush1.msra.mxu0 0.0
        %469 = vmatprep.subr.mxu0 0.0
        %470 = vmatpush1.msra.mxu0 0.0
        %471 = vmatprep.subr.mxu0 0.0
        %472 = vmatpush1.msra.mxu0 0.0
        %473 = vmatprep.subr.mxu0 0.0
        %474 = vmatpush1.msra.mxu0 0.0
        %475 = vmatprep.subr.mxu0 0.0
        %476 = vmatpush1.msra.mxu0 0.0
        %477 = vmatprep.subr.mxu0 0.0
        %478 = vmatpush1.msra.mxu0 0.0
        %479 = vmatprep.subr.mxu0 0.0
        %480 = vmatpush1.msra.mxu0 0.0
        %481 = vmatprep.subr.mxu0 0.0
        %482 = vmatpush1.msra.mxu0 0.0
        %483 = vmatprep.mubr.f32.mxu0 0.0
        %484 = vmatmul.mubr.f32.gmra.mrb[0].mxu0 %v395
        %v485 = vpop.f32.mrb[0].mxu0
        %v486 = vadd.f32 %v417, %v485
        %v487 = vpop.f32.mrb[0].mxu0
        %488 = vdwg.mxu0
        %v489 = vmax.f32 %v486, 0.0
        %v490 = vld [vmem:[%s5] sm:$0xff]
        %v491 = vld [vmem:[%s5 + $0x8] sm:$0xff]
        %v492 = vld [vmem:[%s5 + $0x10] sm:$0xff]
        %v493 = vld [vmem:[%s5 + $0x18] sm:$0xff]
        %v494 = vld [vmem:[%s5 + $0x20] sm:$0xff]
        %v495 = vld [vmem:[%s5 + $0x28] sm:$0xff]
        %v496 = vld [vmem:[%s5 + $0x30] sm:$0xff]
        %v497 = vld [vmem:[%s5 + $0x38] sm:$0xff]
        %v498 = vld [vmem:[%s5 + $0x40] sm:$0xff]
        %v499 = vld [vmem:[%s5 + $0x48] sm:$0xff]
        %v500 = vld [vmem:[%s5 + $0x50] sm:$0xff]
        %v501 = vld [vmem:[%s5 + $0x58] sm:$0xff]
        %v502 = vld [vmem:[%s5 + $0x60] sm:$0xff]
        %v503 = vld [vmem:[%s5 + $0x68] sm:$0xff]
        %v504 = vld [vmem:[%s5 + $0x70] sm:$0xff]
        %v505 = vld [vmem:[%s5 + $0x78] sm:$0xff]
        %v506 = vld [vmem:[%s6] sm:$0x1]
        %v508 = vlaneseq
        %v509 = vshrl.u32 %v508, 7
        %v510 = vsub.s32 0, %v509
        %v511 = vrot.slane %v506, %v510
        %513 = vmatprep.subr.mxu0 0.0
        %514 = vmatpush1.msra.mxu0 %v490
        %515 = vmatprep.subr.mxu0 0.0
        %516 = vmatpush1.msra.mxu0 %v491
        %517 = vmatprep.subr.mxu0 0.0
        %518 = vmatpush1.msra.mxu0 %v492
        %519 = vmatprep.subr.mxu0 0.0
        %520 = vmatpush1.msra.mxu0 %v493
        %521 = vmatprep.subr.mxu0 0.0
        %522 = vmatpush1.msra.mxu0 %v494
        %523 = vmatprep.subr.mxu0 0.0
        %524 = vmatpush1.msra.mxu0 %v495
        %525 = vmatprep.subr.mxu0 0.0
        %526 = vmatpush1.msra.mxu0 %v496
        %527 = vmatprep.subr.mxu0 0.0
        %528 = vmatpush1.msra.mxu0 %v497
        %529 = vmatprep.subr.mxu0 0.0
        %530 = vmatpush1.msra.mxu0 %v498
        %531 = vmatprep.subr.mxu0 0.0
        %532 = vmatpush1.msra.mxu0 %v499
        %533 = vmatprep.subr.mxu0 0.0
        %534 = vmatpush1.msra.mxu0 %v500
        %535 = vmatprep.subr.mxu0 0.0
        %536 = vmatpush1.msra.mxu0 %v501
        %537 = vmatprep.subr.mxu0 0.0
        %538 = vmatpush1.msra.mxu0 %v502
        %539 = vmatprep.subr.mxu0 0.0
        %540 = vmatpush1.msra.mxu0 %v503
        %541 = vmatprep.subr.mxu0 0.0
        %542 = vmatpush1.msra.mxu0 %v504
        %543 = vmatprep.subr.mxu0 0.0
        %544 = vmatpush1.msra.mxu0 %v505
        %545 = vmatprep.subr.mxu0 0.0
        %546 = vmatpush1.msra.mxu0 0.0
        %547 = vmatprep.subr.mxu0 0.0
        %548 = vmatpush1.msra.mxu0 0.0
        %549 = vmatprep.subr.mxu0 0.0
        %550 = vmatpush1.msra.mxu0 0.0
        %551 = vmatprep.subr.mxu0 0.0
        %552 = vmatpush1.msra.mxu0 0.0
        %553 = vmatprep.subr.mxu0 0.0
        %554 = vmatpush1.msra.mxu0 0.0
        %555 = vmatprep.subr.mxu0 0.0
        %556 = vmatpush1.msra.mxu0 0.0
        %557 = vmatprep.subr.mxu0 0.0
        %558 = vmatpush1.msra.mxu0 0.0
        %559 = vmatprep.subr.mxu0 0.0
        %560 = vmatpush1.msra.mxu0 0.0
        %561 = vmatprep.subr.mxu0 0.0
        %562 = vmatpush1.msra.mxu0 0.0
        %563 = vmatprep.subr.mxu0 0.0
        %564 = vmatpush1.msra.mxu0 0.0
        %565 = vmatprep.subr.mxu0 0.0
        %566 = vmatpush1.msra.mxu0 0.0
        %567 = vmatprep.subr.mxu0 0.0
        %568 = vmatpush1.msra.mxu0 0.0
        %569 = vmatprep.subr.mxu0 0.0
        %570 = vmatpush1.msra.mxu0 0.0
        %571 = vmatprep.subr.mxu0 0.0
        %572 = vmatpush1.msra.mxu0 0.0
        %573 = vmatprep.subr.mxu0 0.0
        %574 = vmatpush1.msra.mxu0 0.0
        %575 = vmatprep.subr.mxu0 0.0
        %576 = vmatpush1.msra.mxu0 0.0
        %577 = vmatprep.mubr.f32.mxu0 0.0
        %578 = vmatmul.mubr.f32.gmra.mrb[0].mxu0 %v489
        %v579 = vpop.f32.mrb[0].mxu0
        %v580 = vadd.f32 %v511, %v579
        %v581 = vpop.f32.mrb[0].mxu0
        %582 = vdwg.mxu0
        %vm583 = vcmask 130048
        %584 = vst.msk [vmem:[%s308] sm:$0xff] %vm583, %v580
        %p585 = scmp.lt.s32.totalorder %s22, 3
        %s586 = scalar_select %p585, %s22, 3
        %s587 = smul.addr %s586, 8
        %s588 = scalar_lea.vmem %s7, %s587
        // Predicated region
        $region57: #{tpu_custom_call.1} parent=47 // pred_check
          %p589 = pneg %p192
        $region58: #{tpu_custom_call.1} parent=47 // pred_check_branch
          %591 = sbr.rel (%p589) target = $region60
        $region59: #{tpu_custom_call.1} parent=47 // pred_region
          _
        $region60: #{tpu_custom_call.1} parent=47 // pred_fallthru
          _
      $region48: #{tpu_custom_call.1} parent=5 // pred_fallthru
        _
      %p592 = scmp.le.s32.totalorder 2, %s17
      // Predicated region
      $region61: #{tpu_custom_call.1} parent=5 // pred_check
        %p593 = pneg %p592
      $region62: #{tpu_custom_call.1} parent=5 // pred_check_branch
        %595 = sbr.rel (%p593) target = $region64
      $region63: #{tpu_custom_call.1} parent=5 // pred_region
        %s596 = ssub.s32 %s17, 2
        // Predicated region
        $region65: #{tpu_custom_call.1} parent=63 // pred_check
          %p597 = pneg %p198
        $region66: #{tpu_custom_call.1} parent=63 // pred_check_branch
          %599 = sbr.rel (%p597) target = $region68
        $region67: #{tpu_custom_call.1} parent=63 // pred_region
          %p600 = scmp.lt.s32.totalorder %s23, 3
          %s601 = scalar_select %p600, %s23, 3
          %s602 = smul.addr %s601, 8
          %s603 = scalar_lea.vmem %s7, %s602
        $region68: #{tpu_custom_call.1} parent=63 // pred_fallthru
          _
      $region64: #{tpu_custom_call.1} parent=5 // pred_fallthru
        _
    $region6: #{tpu_custom_call.1} parent=1 // loop_footer
      %s21 = sadd.s32 1, %s17
    $region7: #{tpu_custom_call.1} parent=1 // loop_footer_branch
      %16 = sbr.rel target = $region3
    $region8: #{tpu_custom_call.1} parent=1 // loop_exit
      _
    %604 = vsyncpa [#allocation3], 1
    %s605 = scalar_lea.sflag [#allocation3], 1
    %606 = vsyncpa %s605, 1
    %607 = vsyncpa [#allocation5], 1

</llo_original>
